<compile_context>
chip_gen: v5e
topology: v5e:2x2
jax: 0.10.0
libtpu: 0.0.40
codegen_flags: <defaults>
</compile_context>

<pallas_src>
import jax
import jax.numpy as jnp
from jax.experimental import pallas as pl
from jax.experimental.pallas import tpu as pltpu


# --------------------------------------------------------------------------
# Kernel
# --------------------------------------------------------------------------
def _actor_kernel(state_ref, slab1_ref, slab2_ref, head_ref, heads_ref):
    S = slab1_ref.shape[0] - 1          # state_dim
    H = slab1_ref.shape[1]              # (padded) hidden width
    A2 = heads_ref.shape[1]             # 2 * action_dim
    A = A2 // 2

    x = state_ref[...]                                                  # [Bt, S]

    # Layer 1: relu(x @ W1 + b1)
    w1 = slab1_ref[:S, :]                                               # [S, H]
    b1 = slab1_ref[S:, :]                                               # [1, H]
    h1 = jnp.dot(x, w1, preferred_element_type=jnp.float32)             # MXU
    h1 = jnp.maximum(h1 + b1, 0.0)                                      # VPU

    # Layer 2: relu(h1 @ W2 + b2)
    w2 = slab2_ref[:H, :]                                               # [H, H]
    b2 = slab2_ref[H:, :]                                               # [1, H]
    h2 = jnp.dot(h1, w2, preferred_element_type=jnp.float32)            # MXU
    h2 = jnp.maximum(h2 + b2, 0.0)                                      # VPU

    # Fused heads: [mean | log_std] = h2 @ [Wm | Ws] + [bm | bs]
    wh = head_ref[:H, :]                                                # [H, 2A]
    bh = head_ref[H:, :]                                                # [1, 2A]
    heads = jnp.dot(h2, wh, preferred_element_type=jnp.float32) + bh    # [Bt, 2A]

    # Column mask: mean columns pass through, std columns = exp(clip(., -20, 2)).
    # No cross-lane slicing/shifting; exp runs on the EUP slot.
    col = jax.lax.broadcasted_iota(jnp.int32, heads.shape, dimension=1)
    std_part = jnp.exp(jnp.clip(heads, -20.0, 2.0))
    heads_ref[...] = jnp.where(col >= A, std_part, heads)


# --------------------------------------------------------------------------
# One-time parameter packing (hoist out of any training/step loop)
# --------------------------------------------------------------------------
def pack_actor_params(actor_fc1, actor_fc2, actor_mean, actor_log_std,
                      *, state_dim, action_dim, hidden=64, hidden_pad=128):
    """Flat PyTorch-layout params -> three kernel-ready [in+1, out] slabs.

    The hidden dimension is zero-padded to `hidden_pad` (lane-dense VPU path);
    ReLU(0) = 0 keeps the padded units inert so results are bit-identical."""
    H, Hp = hidden, hidden_pad
    assert Hp >= H

    # Layer 1: [S+1, Hp]
    w1 = actor_fc1[: H * state_dim].reshape(H, state_dim).T               # [S, H]
    b1 = actor_fc1[H * state_dim:].reshape(1, H)                          # [1, H]
    slab1 = jnp.concatenate(
        [jnp.pad(w1, ((0, 0), (0, Hp - H))),
         jnp.pad(b1, ((0, 0), (0, Hp - H)))], axis=0)                     # [S+1, Hp]

    # Layer 2: [Hp+1, Hp]
    w2 = actor_fc2[: H * H].reshape(H, H).T                               # [H, H]
    b2 = actor_fc2[H * H:].reshape(1, H)                                  # [1, H]
    slab2 = jnp.concatenate(
        [jnp.pad(w2, ((0, Hp - H), (0, Hp - H))),
         jnp.pad(b2, ((0, 0), (0, Hp - H)))], axis=0)                     # [Hp+1, Hp]

    # Fused heads: [Hp+1, 2A]
    wm = actor_mean[: action_dim * H].reshape(action_dim, H).T            # [H, A]
    bm = actor_mean[action_dim * H:].reshape(1, action_dim)               # [1, A]
    ws = actor_log_std[: action_dim * H].reshape(action_dim, H).T         # [H, A]
    bs = actor_log_std[action_dim * H:].reshape(1, action_dim)            # [1, A]
    wh = jnp.pad(jnp.concatenate([wm, ws], axis=1), ((0, Hp - H), (0, 0)))  # [Hp, 2A]
    bh = jnp.concatenate([bm, bs], axis=1)                                # [1, 2A]
    slab_head = jnp.concatenate([wh, bh], axis=0)                         # [Hp+1, 2A]

    return slab1, slab2, slab_head


def _round_up(x, m):
    return ((x + m - 1) // m) * m


def _choose_block_b(B):
    """Batch tile size.

    * B <= 8           : one tile equal to the full batch (exact shape).
    * 8 < B < 256      : one tile rounded up to a sublane multiple (launch
                         overhead dominates; splitting does not pay).
    * B >= 256         : at least two parallel tiles (v7x has 2 TensorCores),
                         capped at 512 rows per tile (sweet spot for per-step
                         pipeline overhead vs. spill traffic)."""
    if B <= 8:
        return B
    if B < 256:
        return _round_up(B, 8)
    return min(512, _round_up(pl.cdiv(B, 2), 8))


# --------------------------------------------------------------------------
# Forward with pre-packed params (the hot-path entry point)
# --------------------------------------------------------------------------
def actor_forward_packed(state, slab1, slab2, slab_head):
    """state: [B, state_dim] f32; slabs from pack_actor_params.

    Returns (mean [B, A], std [B, A])."""
    B, S = state.shape
    H = slab1.shape[1]
    A2 = slab_head.shape[1]
    A = A2 // 2

    block_b = _choose_block_b(B)
    grid = (pl.cdiv(B, block_b),)       # ragged last tile is masked by Pallas

    # Advisory cost hint so XLA schedules neighbors around this short kernel.
    flops = 2 * B * (S * H + H * H + H * A2)
    bytes_accessed = (B * (S + A2) * 4
                      + (slab1.size + slab2.size + slab_head.size) * 4)
    cost = pl.CostEstimate(flops=flops, transcendentals=B * A2,
                           bytes_accessed=bytes_accessed)

    # Weight slabs: full-array blocks with a constant index_map -> loaded once
    # and held resident in VMEM across all batch tiles.
    resident = lambda a: pl.BlockSpec(a.shape, lambda i: (0, 0))

    heads = pl.pallas_call(
        _actor_kernel,
        out_shape=jax.ShapeDtypeStruct((B, A2), jnp.float32),
        grid=grid,
        in_specs=[
            pl.BlockSpec((block_b, S), lambda i: (i, 0)),   # state, batch-tiled
            resident(slab1),
            resident(slab2),
            resident(slab_head),
        ],
        out_specs=pl.BlockSpec((block_b, A2), lambda i: (i, 0)),
        compiler_params=pltpu.CompilerParams(
            dimension_semantics=("parallel",)),
        cost_estimate=cost,
    )(state, slab1, slab2, slab_head)

    # Split the fused [B, 2A] slab into (mean, std) outside the kernel.
    return heads[:, :A], heads[:, A:]


actor_forward_packed_jit = jax.jit(actor_forward_packed)


# --------------------------------------------------------------------------
# Convenience wrapper matching the PyTorch forward() signature
# (packs per call -- prefer packing once + actor_forward_packed in a loop)
# --------------------------------------------------------------------------
def actor_forward(state, actor_fc1, actor_fc2, actor_mean, actor_log_std,
                  *, state_dim, action_dim, hidden=64):
    slabs = pack_actor_params(actor_fc1, actor_fc2, actor_mean, actor_log_std,
                              state_dim=state_dim, action_dim=action_dim,
                              hidden=hidden)
    return actor_forward_packed(state, *slabs)


# --------------------------------------------------------------------------
# Pure-JAX reference (mirrors the PyTorch module)
# --------------------------------------------------------------------------
def _reference_forward(state, actor_fc1, actor_fc2, actor_mean, actor_log_std,
                       *, state_dim, action_dim, hidden=64):
    w1 = actor_fc1[: hidden * state_dim].reshape(hidden, state_dim)
    b1 = actor_fc1[hidden * state_dim:]
    x = jnp.maximum(state @ w1.T + b1, 0.0)
    w2 = actor_fc2[: hidden * hidden].reshape(hidden, hidden)
    b2 = actor_fc2[hidden * hidden:]
    x = jnp.maximum(x @ w2.T + b2, 0.0)
    wm = actor_mean[: action_dim * hidden].reshape(action_dim, hidden)
    bm = actor_mean[action_dim * hidden:]
    mean = x @ wm.T + bm
    ws = actor_log_std[: action_dim * hidden].reshape(action_dim, hidden)
    bs = actor_log_std[action_dim * hidden:]
    log_std = jnp.clip(x @ ws.T + bs, -20.0, 2.0)
    return mean, jnp.exp(log_std)


def _xavier_flat(key, out_dim, in_dim):
    """Flat [out*in + out] vector: xavier-uniform weight, zero bias."""
    limit = jnp.sqrt(6.0 / (in_dim + out_dim))
    w = jax.random.uniform(key, (out_dim * in_dim,), jnp.float32, -limit, limit)
    b = jnp.zeros((out_dim,), jnp.float32)
    return jnp.concatenate([w, b])


if __name__ == "__main__":
    STATE_DIM, ACTION_DIM, HIDDEN = 8, 4, 64

    key = jax.random.PRNGKey(0)
    k_state, k1, k2, k3, k4, k_tiny, k_big = jax.random.split(key, 7)

    actor_fc1 = _xavier_flat(k1, HIDDEN, STATE_DIM)       # [64*S + 64]
    actor_fc2 = _xavier_flat(k2, HIDDEN, HIDDEN)          # [64*64 + 64]
    actor_mean = _xavier_flat(k3, ACTION_DIM, HIDDEN)     # [A*64 + A]
    actor_log_std = _xavier_flat(k4, ACTION_DIM, HIDDEN)  # [A*64 + A]

    # Pack once (outside the "step loop").
    slab1, slab2, slab_head = pack_actor_params(
        actor_fc1, actor_fc2, actor_mean, actor_log_std,
        state_dim=STATE_DIM, action_dim=ACTION_DIM, hidden=HIDDEN)

    def check(batch_key, batch):
        state = jax.random.normal(batch_key, (batch, STATE_DIM), jnp.float32)
        mean, std = actor_forward_packed_jit(state, slab1, slab2, slab_head)
        jax.block_until_ready((mean, std))
        ref_mean, ref_std = _reference_forward(
            state, actor_fc1, actor_fc2, actor_mean, actor_log_std,
            state_dim=STATE_DIM, action_dim=ACTION_DIM, hidden=HIDDEN)
        assert mean.shape == (batch, ACTION_DIM) and std.shape == (batch, ACTION_DIM)
        assert jnp.allclose(mean, ref_mean, atol=1e-5, rtol=1e-5)
        assert jnp.allclose(std, ref_std, atol=1e-5, rtol=1e-5)

    check(k_state, 8)      # small batch, single exact tile
    check(k_tiny, 5)       # tiny batch, tile == full array (non-multiple of 8)
    check(k_big, 1000)     # large batch: 2 parallel tiles, ragged last tile

    # TODO(synk): Actor.sample (Normal.rsample / tanh squashing / log_prob) is
    # not part of forward(); only forward() is implemented in the kernel.
    print("KERNEL_OK")
</pallas_src>

<mosaic_0001>
module attributes {stable_mosaic.version = 11 : i64} {
  func.func @_actor_kernel(%arg0: i32, %arg1: memref<8x8xf32, #tpu.memory_space<vmem>>, %arg2: memref<9x128xf32, #tpu.memory_space<vmem>>, %arg3: memref<129x128xf32, #tpu.memory_space<vmem>>, %arg4: memref<129x8xf32, #tpu.memory_space<vmem>>, %arg5: memref<8x8xf32, #tpu.memory_space<vmem>>) attributes {dimension_semantics = [#tpu.dimension_semantics<parallel>], iteration_bounds = array<i64: 1>, scalar_prefetch = 0 : i64, scratch_operands = 0 : i64, tpu.core_type = #tpu.core_type<tc>, window_params = [{transform_indices = @transform_0, window_bounds = array<i64: 8, 8>}, {pipeline_mode = #tpu.pipeline_mode<synchronous>, transform_indices = @transform_1, window_bounds = array<i64: 9, 128>}, {pipeline_mode = #tpu.pipeline_mode<synchronous>, transform_indices = @transform_2, window_bounds = array<i64: 129, 128>}, {pipeline_mode = #tpu.pipeline_mode<synchronous>, transform_indices = @transform_3, window_bounds = array<i64: 129, 8>}, {transform_indices = @transform_4, window_bounds = array<i64: 8, 8>}]} {
    %c0 = arith.constant 0 : index
    %c0_0 = arith.constant 0 : index
    %0 = vector.load %arg1[%c0, %c0_0] : memref<8x8xf32, #tpu.memory_space<vmem>>, vector<8x8xf32>
    %c0_1 = arith.constant 0 : index
    %c0_2 = arith.constant 0 : index
    %1 = vector.load %arg2[%c0_1, %c0_2] : memref<9x128xf32, #tpu.memory_space<vmem>>, vector<8x128xf32>
    %c8 = arith.constant 8 : index
    %c0_3 = arith.constant 0 : index
    %2 = vector.load %arg2[%c8, %c0_3] : memref<9x128xf32, #tpu.memory_space<vmem>>, vector<1x128xf32>
    %cst = arith.constant dense<0.000000e+00> : vector<8x128xf32>
    %3 = tpu.matmul %0, %1, %cst {dimension_numbers = #tpu.dot_dimension_numbers<[1], [0], [0], [1], [0, 0, 1, 1], [], []>} : vector<8x8xf32>, vector<8x128xf32>, vector<8x128xf32> -> vector<8x128xf32>
    %4 = vector.broadcast %2 : vector<1x128xf32> to vector<8x128xf32>
    %5 = arith.addf %3, %4 : vector<8x128xf32>
    %cst_4 = arith.constant 0.000000e+00 : f32
    %6 = vector.broadcast %cst_4 : f32 to vector<8x128xf32>
    %7 = arith.maximumf %5, %6 : vector<8x128xf32>
    %c0_5 = arith.constant 0 : index
    %c0_6 = arith.constant 0 : index
    %8 = vector.load %arg3[%c0_5, %c0_6] : memref<129x128xf32, #tpu.memory_space<vmem>>, vector<128x128xf32>
    %c128 = arith.constant 128 : index
    %c0_7 = arith.constant 0 : index
    %9 = vector.load %arg3[%c128, %c0_7] : memref<129x128xf32, #tpu.memory_space<vmem>>, vector<1x128xf32>
    %cst_8 = arith.constant dense<0.000000e+00> : vector<8x128xf32>
    %10 = tpu.matmul %7, %8, %cst_8 {dimension_numbers = #tpu.dot_dimension_numbers<[1], [0], [0], [1], [0, 0, 1, 1], [], []>} : vector<8x128xf32>, vector<128x128xf32>, vector<8x128xf32> -> vector<8x128xf32>
    %11 = vector.broadcast %9 : vector<1x128xf32> to vector<8x128xf32>
    %12 = arith.addf %10, %11 : vector<8x128xf32>
    %cst_9 = arith.constant 0.000000e+00 : f32
    %13 = vector.broadcast %cst_9 : f32 to vector<8x128xf32>
    %14 = arith.maximumf %12, %13 : vector<8x128xf32>
    %c0_10 = arith.constant 0 : index
    %c0_11 = arith.constant 0 : index
    %15 = vector.load %arg4[%c0_10, %c0_11] : memref<129x8xf32, #tpu.memory_space<vmem>>, vector<128x8xf32>
    %c128_12 = arith.constant 128 : index
    %c0_13 = arith.constant 0 : index
    %16 = vector.load %arg4[%c128_12, %c0_13] : memref<129x8xf32, #tpu.memory_space<vmem>>, vector<1x8xf32>
    %cst_14 = arith.constant dense<0.000000e+00> : vector<8x8xf32>
    %17 = tpu.matmul %14, %15, %cst_14 {dimension_numbers = #tpu.dot_dimension_numbers<[1], [0], [0], [1], [0, 0, 1, 1], [], []>} : vector<8x128xf32>, vector<128x8xf32>, vector<8x8xf32> -> vector<8x8xf32>
    %18 = vector.broadcast %16 : vector<1x8xf32> to vector<8x8xf32>
    %19 = arith.addf %17, %18 : vector<8x8xf32>
    %20 = tpu.iota {dimensions = array<i32: 1>} : vector<8x8xi32>
    %cst_15 = arith.constant -2.000000e+01 : f32
    %cst_16 = arith.constant 2.000000e+00 : f32
    %21 = vector.broadcast %cst_15 : f32 to vector<8x8xf32>
    %22 = arith.maximumf %21, %19 : vector<8x8xf32>
    %23 = vector.broadcast %cst_16 : f32 to vector<8x8xf32>
    %24 = arith.minimumf %23, %22 : vector<8x8xf32>
    %25 = math.exp %24 : vector<8x8xf32>
    %c4_i32 = arith.constant 4 : i32
    %26 = vector.broadcast %c4_i32 : i32 to vector<8x8xi32>
    %27 = arith.cmpi sge, %20, %26 : vector<8x8xi32>
    %28 = arith.select %27, %25, %19 : vector<8x8xi1>, vector<8x8xf32>
    %c0_17 = arith.constant 0 : index
    %c0_18 = arith.constant 0 : index
    %29 = vector.load %arg5[%c0_17, %c0_18] : memref<8x8xf32, #tpu.memory_space<vmem>>, vector<8x8xf32>
    tpu.vector_store %arg5[%c0_17, %c0_18], %28 {strides = array<i32>} : memref<8x8xf32, #tpu.memory_space<vmem>>, vector<8x8xf32>,
    return
  }
  func.func @transform_0(%arg0: i32) -> (i32, i32) {
    %c0_i32 = arith.constant 0 : i32
    %c0_i32_0 = arith.constant 0 : i32
    return %arg0, %c0_i32 : i32, i32
  }
  func.func @transform_1(%arg0: i32) -> (i32, i32) {
    %c0_i32 = arith.constant 0 : i32
    %c0_i32_0 = arith.constant 0 : i32
    %c0_i32_1 = arith.constant 0 : i32
    return %c0_i32, %c0_i32_0 : i32, i32
  }
  func.func @transform_2(%arg0: i32) -> (i32, i32) {
    %c0_i32 = arith.constant 0 : i32
    %c0_i32_0 = arith.constant 0 : i32
    %c0_i32_1 = arith.constant 0 : i32
    return %c0_i32, %c0_i32_0 : i32, i32
  }
  func.func @transform_3(%arg0: i32) -> (i32, i32) {
    %c0_i32 = arith.constant 0 : i32
    %c0_i32_0 = arith.constant 0 : i32
    %c0_i32_1 = arith.constant 0 : i32
    return %c0_i32, %c0_i32_0 : i32, i32
  }
  func.func @transform_4(%arg0: i32) -> (i32, i32) {
    %c0_i32 = arith.constant 0 : i32
    %c0_i32_0 = arith.constant 0 : i32
    return %arg0, %c0_i32 : i32, i32
  }
}

</mosaic_0001>

<llo_original>
// kernel: actor_forward_packed.1
$region0: #{actor_forward_packed.1}
  #allocation0 [shape = 'u32[]', space=smem, size = 0x4, offset = 0x4, fixed_abs, tag = 'smem constant byte address 0x4 - core index']
  #allocation1 [shape = 'u32[72,128]{1,0:T(1,128)}', space=vmem, size = 0x9000, scoped, tag = 'internal scratch']
  %s0 = inlined_call_operand.hbm [shape: f32[8,8], index: 0, kind: input, shape index: {}]
  %s1 = inlined_call_operand.vmem [shape: f32[9,128], index: 1, kind: input, shape index: {}]
  %s2 = inlined_call_operand.vmem [shape: f32[129,128], index: 2, kind: input, shape index: {}]
  %s3 = inlined_call_operand.vmem [shape: f32[129,8], index: 3, kind: input, shape index: {}]
  %s4 = inlined_call_operand.vmem [shape: f32[8,8], index: 4, kind: output, shape index: {}]
  %s5 = sld [smem:[#allocation0]]
  $region30: #{actor_forward_packed.1} parent=0
    _
  %s7 = ssub.s32 1, %s5
  %s8 = scalar_select 0, %s7, %s5
  $region1: #{actor_forward_packed.1} parent=0
    #allocation2 [shape = 'u8[4096]{0}', space=vmem, size = 0x1000, scoped, tag = 'input window, operand 0, single buffered']
    #allocation3 [shape = 's32[1]{0}', space=sflag, size = 0x4, scoped, tag = 'scoped memory for actor_forward_packed.1']
    %9 = vsyncpa [#allocation3], 0
    // Predicated region
    $region2: #{actor_forward_packed.1} parent=1 // pred_check
      _
    $region3: #{actor_forward_packed.1} parent=1 // pred_check_branch
      %11 = sbr.rel (0) target = $region5
    $region4: #{actor_forward_packed.1} parent=1 // pred_region
      %13 = vsyncadd [#allocation3], 0
      %s15 = sshll.u32 %s0, 4
      %s16 = int_to_ptr.hbm [resolvable:$true] %s15
      %s17 = sshll.u32 [#allocation2], 4
      %s18 = int_to_ptr.vmem [resolvable:$true] %s17
      %20 = dma.hbm_to_vmem [thread:$0]  %s16, 128, %s18, [#allocation3]
    $region5: #{actor_forward_packed.1} parent=1 // pred_fallthru
      _
    // Predicated region
    $region6: #{actor_forward_packed.1} parent=1 // pred_check
      _
    $region7: #{actor_forward_packed.1} parent=1 // pred_check_branch
      %22 = sbr.rel (0) target = $region9
    $region8: #{actor_forward_packed.1} parent=1 // pred_region
      _
    $region9: #{actor_forward_packed.1} parent=1 // pred_fallthru
      _
    // Predicated region
    $region10: #{actor_forward_packed.1} parent=1 // pred_check
      _
    $region11: #{actor_forward_packed.1} parent=1 // pred_check_branch
      %24 = sbr.rel (0) target = $region13
    $region12: #{actor_forward_packed.1} parent=1 // pred_region
      _
    $region13: #{actor_forward_packed.1} parent=1 // pred_fallthru
      _
    // Predicated region
    $region14: #{actor_forward_packed.1} parent=1 // pred_check
      _
    $region15: #{actor_forward_packed.1} parent=1 // pred_check_branch
      %26 = sbr.rel (0) target = $region17
    $region16: #{actor_forward_packed.1} parent=1 // pred_region
      _
    $region17: #{actor_forward_packed.1} parent=1 // pred_fallthru
      _
    // Predicated region
    $region18: #{actor_forward_packed.1} parent=1 // pred_check
      _
    $region19: #{actor_forward_packed.1} parent=1 // pred_check_branch
      %28 = sbr.rel (0) target = $region21
    $region20: #{actor_forward_packed.1} parent=1 // pred_region
      %30 = dma.done [#allocation3], 128
    $region21: #{actor_forward_packed.1} parent=1 // pred_fallthru
      _
    %v31 = vld [vmem:[#allocation2] sm:$0xff]
    %v32 = vld [vmem:[%s1] sm:$0xff]
    %v33 = vld [vmem:[%s1 + $0x8] sm:$0x1]
    %v34 = vperm.slane %v33, 0
    %vm35 = vcmask 64512
    %v37 = vsel %vm35, %v31, 0
    %39 = vmatpush.msra.mxu0 0.0
    %40 = vmatpush.msra.mxu0 0.0
    %41 = vmatpush.msra.mxu0 0.0
    %42 = vmatpush.msra.mxu0 0.0
    %43 = vmatpush.msra.mxu0 0.0
    %44 = vmatpush.msra.mxu0 0.0
    %45 = vmatpush.msra.mxu0 0.0
    %46 = vmatpush.msra.mxu0 0.0
    %47 = vmatpush.msra.mxu0 0.0
    %48 = vmatpush.msra.mxu0 0.0
    %49 = vmatpush.msra.mxu0 0.0
    %50 = vmatpush.msra.mxu0 0.0
    %51 = vmatpush.msra.mxu0 0.0
    %52 = vmatpush.msra.mxu0 0.0
    %53 = vmatpush.msra.mxu0 0.0
    %54 = vmatpush.msra.mxu0 %v32
    %55 = vmatmul.f32.gmra.mxu0 %v37
    %v56 = vpop.f32.mrf.mxu0
    %v57 = vadd.f32 %v34, %v56
    %58 = vdwg.mxu0
    %v59 = vmax.f32 %v57, 0.0
    %v60 = vld [vmem:[%s2] sm:$0xff]
    %v61 = vld [vmem:[%s2 + $0x8] sm:$0xff]
    %v62 = vld [vmem:[%s2 + $0x10] sm:$0xff]
    %v63 = vld [vmem:[%s2 + $0x18] sm:$0xff]
    %v64 = vld [vmem:[%s2 + $0x20] sm:$0xff]
    %v65 = vld [vmem:[%s2 + $0x28] sm:$0xff]
    %v66 = vld [vmem:[%s2 + $0x30] sm:$0xff]
    %v67 = vld [vmem:[%s2 + $0x38] sm:$0xff]
    %v68 = vld [vmem:[%s2 + $0x40] sm:$0xff]
    %v69 = vld [vmem:[%s2 + $0x48] sm:$0xff]
    %v70 = vld [vmem:[%s2 + $0x50] sm:$0xff]
    %v71 = vld [vmem:[%s2 + $0x58] sm:$0xff]
    %v72 = vld [vmem:[%s2 + $0x60] sm:$0xff]
    %v73 = vld [vmem:[%s2 + $0x68] sm:$0xff]
    %v74 = vld [vmem:[%s2 + $0x70] sm:$0xff]
    %v75 = vld [vmem:[%s2 + $0x78] sm:$0xff]
    %v76 = vld [vmem:[%s2 + $0x80] sm:$0x1]
    %v77 = vperm.slane %v76, 0
    %78 = vmatpush.msra.mxu0 %v75
    %79 = vmatpush.msra.mxu0 %v74
    %80 = vmatpush.msra.mxu0 %v73
    %81 = vmatpush.msra.mxu0 %v72
    %82 = vmatpush.msra.mxu0 %v71
    %83 = vmatpush.msra.mxu0 %v70
    %84 = vmatpush.msra.mxu0 %v69
    %85 = vmatpush.msra.mxu0 %v68
    %86 = vmatpush.msra.mxu0 %v67
    %87 = vmatpush.msra.mxu0 %v66
    %88 = vmatpush.msra.mxu0 %v65
    %89 = vmatpush.msra.mxu0 %v64
    %90 = vmatpush.msra.mxu0 %v63
    %91 = vmatpush.msra.mxu0 %v62
    %92 = vmatpush.msra.mxu0 %v61
    %93 = vmatpush.msra.mxu0 %v60
    %94 = vmatmul.f32.gmra.mxu0 %v59
    %v95 = vpop.f32.mrf.mxu0
    %v96 = vadd.f32 %v77, %v95
    %97 = vdwg.mxu0
    %v98 = vmax.f32 %v96, 0.0
    %v99 = vld [vmem:[%s3] sm:$0xff]
    %v100 = vld [vmem:[%s3 + $0x8] sm:$0xff]
    %v101 = vld [vmem:[%s3 + $0x10] sm:$0xff]
    %v102 = vld [vmem:[%s3 + $0x18] sm:$0xff]
    %v103 = vld [vmem:[%s3 + $0x20] sm:$0xff]
    %v104 = vld [vmem:[%s3 + $0x28] sm:$0xff]
    %v105 = vld [vmem:[%s3 + $0x30] sm:$0xff]
    %v106 = vld [vmem:[%s3 + $0x38] sm:$0xff]
    %v107 = vld [vmem:[%s3 + $0x40] sm:$0xff]
    %v108 = vld [vmem:[%s3 + $0x48] sm:$0xff]
    %v109 = vld [vmem:[%s3 + $0x50] sm:$0xff]
    %v110 = vld [vmem:[%s3 + $0x58] sm:$0xff]
    %v111 = vld [vmem:[%s3 + $0x60] sm:$0xff]
    %v112 = vld [vmem:[%s3 + $0x68] sm:$0xff]
    %v113 = vld [vmem:[%s3 + $0x70] sm:$0xff]
    %v114 = vld [vmem:[%s3 + $0x78] sm:$0xff]
    %v115 = vld [vmem:[%s3 + $0x80] sm:$0x1]
    %v116 = vperm.slane %v115, 0
    %117 = vmatpush.msra.mxu0 %v114
    %118 = vmatpush.msra.mxu0 %v113
    %119 = vmatpush.msra.mxu0 %v112
    %120 = vmatpush.msra.mxu0 %v111
    %121 = vmatpush.msra.mxu0 %v110
    %122 = vmatpush.msra.mxu0 %v109
    %123 = vmatpush.msra.mxu0 %v108
    %124 = vmatpush.msra.mxu0 %v107
    %125 = vmatpush.msra.mxu0 %v106
    %126 = vmatpush.msra.mxu0 %v105
    %127 = vmatpush.msra.mxu0 %v104
    %128 = vmatpush.msra.mxu0 %v103
    %129 = vmatpush.msra.mxu0 %v102
    %130 = vmatpush.msra.mxu0 %v101
    %131 = vmatpush.msra.mxu0 %v100
    %132 = vmatpush.msra.mxu0 %v99
    %133 = vmatmul.f32.gmra.mxu0 %v98
    %v134 = vpop.f32.mrf.mxu0
    %v135 = vadd.f32 %v116, %v134
    %136 = vdwg.mxu0
    %v137 = vlaneseq
    %v138 = vand.u32 %v137, 127
    %v139 = vmax.f32 %v135, -20.0
    %v140 = vmin.f32 %v139, 2.0
    %v141 = vmul.f32 %v140, 1.442695
    %v142 = vpow.pop %v141
    %vm143 = vcmp.ge.s32.totalorder %v138, 4
    %v144 = vsel %vm143, %v142, %v135
    %145 = vst.msk [vmem:[%s4] sm:$0xff] %vm35, %v144
    // Predicated region
    $region22: #{actor_forward_packed.1} parent=1 // pred_check
      _
    $region23: #{actor_forward_packed.1} parent=1 // pred_check_branch
      %147 = sbr.rel (0) target = $region25
    $region24: #{actor_forward_packed.1} parent=1 // pred_region
      _
    $region25: #{actor_forward_packed.1} parent=1 // pred_fallthru
      _
    // Predicated region
    $region26: #{actor_forward_packed.1} parent=1 // pred_check
      _
    $region27: #{actor_forward_packed.1} parent=1 // pred_check_branch
      %149 = sbr.rel (0) target = $region29
    $region28: #{actor_forward_packed.1} parent=1 // pred_region
      _
    $region29: #{actor_forward_packed.1} parent=1 // pred_fallthru
      _
    %150 = vsyncpa [#allocation3], 1

</llo_original>
